<compile_context>
chip_gen: v7x
topology: tpu7x:2x2x1
jax: 0.10.0
libtpu: 0.0.40
codegen_flags: <defaults>
</compile_context>

<pallas_src>
import functools

import jax
import jax.numpy as jnp
from jax.experimental import pallas as pl
from jax.experimental.pallas import tpu as pltpu

_SUBLANE = 8
_MAX_TILE_ROWS = 1024        # >=512-row tiles reach ~85% of HBM roofline (v6e)
_TARGET_TILE_ROWS = 512


def _round_up(x, m):
    return -(-x // m) * m


def _hw_info():
    """(physical VMEM bytes, #TensorCores per chip). Defensive fallbacks."""
    kind = ""
    try:
        dev = jax.devices()[0]
        if dev.platform == "tpu":
            kind = (getattr(dev, "device_kind", "") or "").lower()
    except Exception:
        kind = ""
    vmem_bytes = None
    try:
        info = pltpu.get_tpu_info()
        vmem_bytes = int(getattr(info, "vmem_capacity_bytes", 0)) or None
    except Exception:
        vmem_bytes = None
    num_cores = 2 if "v7" in kind else 1
    if vmem_bytes is None:
        # Unknown -> assume the smaller (v7x-like) 64 MiB to stay safe.
        vmem_bytes = (64 if ("v7" in kind or not kind) else 128) * 1024 * 1024
    return vmem_bytes, num_cores


def _vmem_budget(vmem_bytes):
    """(pipeline+scratch budget bytes, vmem_limit_bytes) per generation."""
    if vmem_bytes >= 128 * 1024 * 1024:            # v5e / v6e (128 MiB physical)
        return 56 * 1024 * 1024, 96 * 1024 * 1024
    return 30 * 1024 * 1024, 48 * 1024 * 1024      # v7x (64 MiB physical)


def _row_tile(n_rows, v_tile, itemsize, use_label, budget, streams,
              acc_scratch=True):
    """Largest row tile (multiple of 8) whose double-buffered streams plus the
    resident f32 accumulator / output blocks fit the VMEM budget."""
    fixed = (_SUBLANE * v_tile * 4 if acc_scratch else 0) + 2 * _SUBLANE * 128 * 4
    per_row = streams * 2 * v_tile * itemsize + (2 * 4 if use_label else 0)
    avail = max(int(budget) - fixed, per_row * _SUBLANE)
    t = avail // per_row
    t = max(_SUBLANE, min(int(t), _MAX_TILE_ROWS))
    t -= t % _SUBLANE
    return int(min(t, _round_up(n_rows, _SUBLANE)))


def _choose_v_tile(n_rows, vocab, itemsize, use_label, budget, tile_v):
    """V (lane) tile: whole V unless huge-V would collapse the row tile."""
    if tile_v is not None:
        tv = int(tile_v)
        if 0 < tv < vocab and tv % 128 == 0 and vocab % tv == 0:
            return tv
        return vocab
    target = min(_TARGET_TILE_ROWS, _round_up(n_rows, _SUBLANE))
    if _row_tile(n_rows, vocab, itemsize, use_label, budget, streams=2) >= target:
        return vocab                    # whole-V tile already streams well
    if vocab % 128 != 0:
        return vocab                    # cannot tile lanes cleanly
    # Largest multiple-of-128 divisor of vocab that still allows `target` rows.
    per_lane = 2 * 2 * itemsize * target + _SUBLANE * 4
    max_v = max((int(budget) - 64 * 1024) // per_lane, 128)
    cand = (max_v // 128) * 128
    while cand >= 128:
        if vocab % cand == 0:
            return cand
        cand -= 128
    return vocab


def _pick_split(n_rows, tile_n, num_cores, tile_forced):
    """Split row tiles across TensorCores (v7x only).
    Returns (tile_n, n_splits, row_tiles_per_split, total_row_tiles)."""
    total = pl.cdiv(n_rows, tile_n)
    if num_cores >= 2 and total >= 2:
        cand = tile_n
        for _ in range(8):
            t = pl.cdiv(n_rows, cand)
            if t % 2 == 0:              # no fully out-of-bounds blocks
                return cand, 2, t // 2, t
            if tile_forced or cand - _SUBLANE < _SUBLANE:
                break
            cand -= _SUBLANE
        total = pl.cdiv(n_rows, tile_n)
    return tile_n, 1, total, total


def _tvd_sum_kernel(*refs, ignore_index, n_rows, tile_n, tiles_per_split,
                    n_row_tiles, use_label, use_row_mask):
    """Accumulate sum(|p - q|, masked) into a per-(split, V-tile) partial."""
    if use_label:
        p_ref, q_ref, label_ref, out_ref, acc_ref = refs
    else:
        p_ref, q_ref, out_ref, acc_ref = refs
        label_ref = None

    i = pl.program_id(2)                # row-tile index within this split

    @pl.when(i == 0)
    def _():
        acc_ref[...] = jnp.zeros_like(acc_ref)

    # f32 subtract first: avoids bf16 cancellation when p ~ q. The /2 of the
    # TVD definition is folded into the wrapper epilogue (one fewer VPU mul).
    tvd = jnp.abs(p_ref[...].astype(jnp.float32)
                  - q_ref[...].astype(jnp.float32))
    if use_label:
        tvd = jnp.where(label_ref[...] != ignore_index, tvd, 0.0)

    def _accumulate(vals):
        # Fold the (tile_n, v_tile) tile onto the (8, v_tile) accumulator with
        # pure VPU adds (leading-dim split keeps the sublane/lane layout).
        g = tile_n // _SUBLANE
        if g > 1:
            vals = jnp.sum(vals.reshape(g, _SUBLANE, vals.shape[-1]), axis=0)
        acc_ref[...] += vals

    if use_row_mask:
        tile_idx = pl.program_id(0) * tiles_per_split + i
        is_partial = tile_idx == n_row_tiles - 1

        # Only the final (partial) row tile pays the iota/compare/select.
        @pl.when(is_partial)
        def _():
            row = tile_idx * tile_n + jax.lax.broadcasted_iota(
                jnp.int32, (tile_n, 1), 0)
            _accumulate(jnp.where(row < n_rows, tvd, 0.0))

        @pl.when(jnp.logical_not(is_partial))
        def _():
            _accumulate(tvd)
    else:
        _accumulate(tvd)

    # Single cross-lane/sublane reduction per (split, V-tile), last step only.
    @pl.when(i == pl.num_programs(2) - 1)
    def _():
        out_ref[...] = jnp.full(out_ref.shape, jnp.sum(acc_ref[...]),
                                dtype=out_ref.dtype)


def _tvd_none_kernel(*refs, ignore_index, use_label):
    """Elementwise masked tvd, reduction='none'."""
    if use_label:
        p_ref, q_ref, label_ref, out_ref = refs
    else:
        p_ref, q_ref, out_ref = refs
        label_ref = None
    tvd = jnp.abs(p_ref[...].astype(jnp.float32)
                  - q_ref[...].astype(jnp.float32)) * 0.5
    if use_label:
        tvd = jnp.where(label_ref[...] != ignore_index, tvd, 0.0)
    out_ref[...] = tvd.astype(out_ref.dtype)


def tvd_loss(p, q, label=None, *, reduction="batchmean", ignore_index=-100,
             tile_n=None, tile_v=None):
    """JAX/Pallas equivalent of TorchTVDLoss.forward."""
    if reduction not in ("none", "sum", "mean", "batchmean"):
        raise ValueError("Invalid reduction type.")

    n_rows, vocab = p.shape
    use_label = label is not None
    if use_label:
        label_col = label.reshape(n_rows, 1).astype(jnp.int32)
        n_non_ignore = jnp.sum(label != ignore_index).astype(jnp.float32)
    else:
        label_col = None
        n_non_ignore = jnp.float32(n_rows)

    itemsize = jnp.dtype(p.dtype).itemsize
    vmem_bytes, num_cores = _hw_info()
    budget, vmem_limit = _vmem_budget(vmem_bytes)
    tile_forced = tile_n is not None

    def cparams(dims):
        return pltpu.CompilerParams(dimension_semantics=dims,
                                    vmem_limit_bytes=vmem_limit)

    def lead_sem(n_splits):
        if n_splits == 2:
            return getattr(pltpu, "CORE_PARALLEL", "parallel")
        return "arbitrary"

    # ------------------------- reduction == 'none' -------------------------
    if reduction == "none":
        # TODO(synk): for f32 vocab >~ 1M even an 8-row (p,q,out) tile
        # overflows the budget; the 'none' path would then need a V grid axis.
        if tile_forced:
            t_n = max(_SUBLANE, _round_up(int(tile_n), _SUBLANE))
        else:
            t_n = _row_tile(n_rows, vocab, itemsize, use_label, budget,
                            streams=3, acc_scratch=False)
        t_n, n_splits, tiles_per_split, _ = _pick_split(
            n_rows, t_n, num_cores, tile_forced)
        row_map = lambda c, i: (c * tiles_per_split + i, 0)
        in_specs = [pl.BlockSpec((t_n, vocab), row_map),
                    pl.BlockSpec((t_n, vocab), row_map)]
        args = [p, q]
        if use_label:
            in_specs.append(pl.BlockSpec((t_n, 1), row_map))
            args.append(label_col)
        kernel = functools.partial(_tvd_none_kernel,
                                   ignore_index=ignore_index,
                                   use_label=use_label)
        return pl.pallas_call(
            kernel,
            out_shape=jax.ShapeDtypeStruct((n_rows, vocab), p.dtype),
            grid_spec=pltpu.PrefetchScalarGridSpec(
                num_scalar_prefetch=0, grid=(n_splits, tiles_per_split),
                in_specs=in_specs,
                out_specs=pl.BlockSpec((t_n, vocab), row_map)),
            compiler_params=cparams((lead_sem(n_splits), "parallel")),
        )(*args)

    # ----------------- sum-style reductions (sum/mean/batchmean) -----------
    v_tile = _choose_v_tile(n_rows, vocab, itemsize, use_label, budget, tile_v)
    n_v_tiles = vocab // v_tile
    if tile_forced:
        t_n = max(_SUBLANE, _round_up(int(tile_n), _SUBLANE))
    else:
        t_n = _row_tile(n_rows, v_tile, itemsize, use_label, budget, streams=2)
    t_n, n_splits, tiles_per_split, n_row_tiles = _pick_split(
        n_rows, t_n, num_cores, tile_forced)
    use_row_mask = (n_rows % t_n) != 0

    def pq_map(c, v, i):
        return (c * tiles_per_split + i, v)

    def lbl_map(c, v, i):
        return (c * tiles_per_split + i, 0)

    in_specs = [pl.BlockSpec((t_n, v_tile), pq_map),
                pl.BlockSpec((t_n, v_tile), pq_map)]
    args = [p, q]
    if use_label:
        in_specs.append(pl.BlockSpec((t_n, 1), lbl_map))
        args.append(label_col)

    # TODO(synk): on v5e with huge V (row tile stuck <64 rows) consider
    # pipeline_mode=pl.Buffered(3) on the two input specs (account for 3x in
    # the budget) to hide per-step DMA issue latency.

    kernel = functools.partial(
        _tvd_sum_kernel, ignore_index=ignore_index, n_rows=n_rows, tile_n=t_n,
        tiles_per_split=tiles_per_split, n_row_tiles=n_row_tiles,
        use_label=use_label, use_row_mask=use_row_mask)

    partials = pl.pallas_call(
        kernel,
        out_shape=jax.ShapeDtypeStruct((n_splits, n_v_tiles, _SUBLANE, 128),
                                       jnp.float32),
        grid_spec=pltpu.PrefetchScalarGridSpec(
            num_scalar_prefetch=0,
            grid=(n_splits, n_v_tiles, tiles_per_split),
            in_specs=in_specs,
            # Block index constant over the inner row axis -> the per-(split,
            # V-tile) partial stays resident as an accumulator output.
            out_specs=pl.BlockSpec((1, 1, _SUBLANE, 128),
                                   lambda c, v, i: (c, v, 0, 0)),
            scratch_shapes=[pltpu.VMEM((_SUBLANE, v_tile), jnp.float32)]),
        compiler_params=cparams(
            (lead_sem(n_splits), "arbitrary", "arbitrary")),
    )(*args)

    # The /2 from |p - q| / 2 is applied once here instead of per element.
    total = jnp.sum(partials[:, :, 0, 0]) * jnp.float32(0.5)

    if reduction == "sum":
        return total
    if reduction == "mean":
        denom = n_non_ignore * jnp.float32(vocab)
    else:  # batchmean
        denom = n_non_ignore
    loss = total / denom
    if use_label:
        # Torch returns 0.0 if every row is ignored.
        loss = jnp.where(n_non_ignore == 0, jnp.float32(0.0), loss)
    return loss


def _ref_tvd(p, q, label=None, reduction="batchmean", ignore_index=-100):
    """Pure-JAX reference mirroring the PyTorch module (f32 math)."""
    tvd = jnp.abs(p.astype(jnp.float32) - q.astype(jnp.float32)) / 2.0
    n_non_ignore = jnp.float32(p.shape[0])
    if label is not None:
        tvd = jnp.where(label[:, None] != ignore_index, tvd,
                        jnp.zeros_like(tvd))
        n_non_ignore = jnp.sum(label != ignore_index).astype(jnp.float32)
    if reduction == "sum":
        return jnp.sum(tvd)
    if reduction == "none":
        return tvd
    if reduction == "mean":
        res = jnp.sum(tvd) / (n_non_ignore * p.shape[1])
    else:  # batchmean
        res = jnp.sum(tvd) / n_non_ignore
    if label is not None:
        res = jnp.where(n_non_ignore == 0, jnp.float32(0.0), res)
    return res


if __name__ == "__main__":
    key = jax.random.PRNGKey(0)
    ok = True

    def check(a, b, atol=1e-6, rtol=1e-5):
        return bool(jnp.allclose(jnp.asarray(a, jnp.float32),
                                 jnp.asarray(b, jnp.float32),
                                 atol=atol, rtol=rtol))

    # Config A: auto tiles (single tile covers the array).
    # Config B: forced tiny row tile + partial last tile (N % tile != 0) and a
    #           forced 128-lane V tile to exercise the V grid axis.
    for (N, V, f_tn, f_tv) in ((16, 128, None, None), (28, 256, 8, 128)):
        k1, k2, k3, key = jax.random.split(key, 4)
        p = jax.nn.softmax(jax.random.normal(k1, (N, V), jnp.float32), axis=-1)
        q = jax.nn.softmax(jax.random.normal(k2, (N, V), jnp.float32), axis=-1)
        label = jax.random.randint(k3, (N,), 0, V, dtype=jnp.int32)
        label = label.at[3].set(-100).at[N - 2].set(-100)

        for red in ("batchmean", "sum", "mean", "none"):
            out = jax.block_until_ready(
                tvd_loss(p, q, None, reduction=red, tile_n=f_tn, tile_v=f_tv))
            ok &= check(out, _ref_tvd(p, q, None, red))

            out_l = jax.block_until_ready(
                tvd_loss(p, q, label, reduction=red, tile_n=f_tn, tile_v=f_tv))
            ok &= check(out_l, _ref_tvd(p, q, label, red))

    # bf16 inputs exercise the in-kernel f32 subtract path.
    k1, k2, key = jax.random.split(key, 3)
    pb = jax.nn.softmax(jax.random.normal(k1, (24, 256), jnp.float32),
                        axis=-1).astype(jnp.bfloat16)
    qb = jax.nn.softmax(jax.random.normal(k2, (24, 256), jnp.float32),
                        axis=-1).astype(jnp.bfloat16)
    out = jax.block_until_ready(tvd_loss(pb, qb, reduction="batchmean"))
    ok &= check(out, _ref_tvd(pb, qb, None, "batchmean"), atol=1e-5)

    # All labels ignored -> 0.0 for batchmean (matches the torch early return).
    k1, k2, key = jax.random.split(key, 3)
    p = jax.nn.softmax(jax.random.normal(k1, (16, 128), jnp.float32), axis=-1)
    q = jax.nn.softmax(jax.random.normal(k2, (16, 128), jnp.float32), axis=-1)
    all_ign = jnp.full((16,), -100, dtype=jnp.int32)
    out = jax.block_until_ready(tvd_loss(p, q, all_ign, reduction="batchmean"))
    ok &= check(out, jnp.float32(0.0))

    if ok:
        print("KERNEL_OK")
    else:
        raise SystemExit("mismatch vs reference")
</pallas_src>

<mosaic_0001>
module attributes {stable_mosaic.version = 11 : i64} {
  func.func @_tvd_sum_kernel(%arg0: i32, %arg1: i32, %arg2: i32, %arg3: memref<16x128xf32, #tpu.memory_space<vmem>>, %arg4: memref<16x128xf32, #tpu.memory_space<vmem>>, %arg5: memref<1x1x8x128xf32, #tpu.memory_space<vmem>>, %arg6: memref<8x128xf32, #tpu.memory_space<vmem>>) attributes {dimension_semantics = [#tpu.dimension_semantics<arbitrary>, #tpu.dimension_semantics<arbitrary>, #tpu.dimension_semantics<arbitrary>], iteration_bounds = array<i64: 1, 1, 1>, scalar_prefetch = 0 : i64, scratch_operands = 1 : i64, tpu.core_type = #tpu.core_type<tc>, window_params = [{transform_indices = @transform_0, window_bounds = array<i64: 16, 128>}, {transform_indices = @transform_1, window_bounds = array<i64: 16, 128>}, {transform_indices = @transform_2, window_bounds = array<i64: 1, 1, 8, 128>}]} {
    %c0_i32 = arith.constant 0 : i32
    %0 = arith.cmpi eq, %arg2, %c0_i32 : i32
    %1 = arith.extui %0 : i1 to i32
    %c0_i32_0 = arith.constant 0 : i32
    %2 = arith.cmpi ne, %1, %c0_i32_0 : i32
    scf.if %2 {
      %cst_10 = arith.constant 0.000000e+00 : f32
      %15 = vector.broadcast %cst_10 : f32 to vector<8x128xf32>
      %c0_11 = arith.constant 0 : index
      %c0_12 = arith.constant 0 : index
      %16 = vector.load %arg6[%c0_11, %c0_12] : memref<8x128xf32, #tpu.memory_space<vmem>>, vector<8x128xf32>
      tpu.vector_store %arg6[%c0_11, %c0_12], %15 {strides = array<i32>} : memref<8x128xf32, #tpu.memory_space<vmem>>, vector<8x128xf32>,
    } else {
    }
    %c0 = arith.constant 0 : index
    %c0_1 = arith.constant 0 : index
    %3 = vector.load %arg3[%c0, %c0_1] : memref<16x128xf32, #tpu.memory_space<vmem>>, vector<16x128xf32>
    %c0_2 = arith.constant 0 : index
    %c0_3 = arith.constant 0 : index
    %4 = vector.load %arg4[%c0_2, %c0_3] : memref<16x128xf32, #tpu.memory_space<vmem>>, vector<16x128xf32>
    %5 = arith.subf %3, %4 : vector<16x128xf32>
    %6 = math.absf %5 : vector<16x128xf32>
    %7 = vector.shape_cast %6 : vector<16x128xf32> to vector<2x8x128xf32>
    %cst = arith.constant dense<0.000000e+00> : vector<8x128xf32>
    %8 = vector.multi_reduction <add>, %7, %cst [0] : vector<2x8x128xf32> to vector<8x128xf32>
    %c0_4 = arith.constant 0 : index
    %c0_5 = arith.constant 0 : index
    %9 = vector.load %arg6[%c0_4, %c0_5] : memref<8x128xf32, #tpu.memory_space<vmem>>, vector<8x128xf32>
    %10 = arith.addf %9, %8 : vector<8x128xf32>
    %c0_6 = arith.constant 0 : index
    %c0_7 = arith.constant 0 : index
    %11 = vector.load %arg6[%c0_6, %c0_7] : memref<8x128xf32, #tpu.memory_space<vmem>>, vector<8x128xf32>
    tpu.vector_store %arg6[%c0_6, %c0_7], %10 {strides = array<i32>} : memref<8x128xf32, #tpu.memory_space<vmem>>, vector<8x128xf32>,
    %c0_i32_8 = arith.constant 0 : i32
    %12 = arith.cmpi eq, %arg2, %c0_i32_8 : i32
    %13 = arith.extui %12 : i1 to i32
    %c0_i32_9 = arith.constant 0 : i32
    %14 = arith.cmpi ne, %13, %c0_i32_9 : i32
    scf.if %14 {
      %c0_10 = arith.constant 0 : index
      %c0_11 = arith.constant 0 : index
      %15 = vector.load %arg6[%c0_10, %c0_11] : memref<8x128xf32, #tpu.memory_space<vmem>>, vector<8x128xf32>
      %16 = vector.shape_cast %15 : vector<8x128xf32> to vector<1x8x128xf32>
      %cst_12 = arith.constant dense<0.000000e+00> : vector<1xf32>
      %17 = vector.multi_reduction <add>, %16, %cst_12 [1, 2] : vector<1x8x128xf32> to vector<1xf32>
      %18 = vector.shape_cast %17 : vector<1xf32> to vector<1x1x1xf32>
      %19 = vector.extract %18[0, 0, 0] : f32 from vector<1x1x1xf32>
      %20 = vector.broadcast %19 : f32 to vector<1x1x8x128xf32>
      %c0_13 = arith.constant 0 : index
      %c0_14 = arith.constant 0 : index
      %c0_15 = arith.constant 0 : index
      %c0_16 = arith.constant 0 : index
      %21 = vector.load %arg5[%c0_13, %c0_14, %c0_15, %c0_16] : memref<1x1x8x128xf32, #tpu.memory_space<vmem>>, vector<1x1x8x128xf32>
      tpu.vector_store %arg5[%c0_13, %c0_14, %c0_15, %c0_16], %20 {strides = array<i32>} : memref<1x1x8x128xf32, #tpu.memory_space<vmem>>, vector<1x1x8x128xf32>,
    } else {
    }
    return
  }
  func.func @transform_0(%arg0: i32, %arg1: i32, %arg2: i32) -> (i32, i32) {
    %c1_i32 = arith.constant 1 : i32
    %0 = arith.muli %arg0, %c1_i32 : i32
    %1 = arith.addi %0, %arg2 : i32
    %c0_i32 = arith.constant 0 : i32
    return %1, %arg1 : i32, i32
  }
  func.func @transform_1(%arg0: i32, %arg1: i32, %arg2: i32) -> (i32, i32) {
    %c1_i32 = arith.constant 1 : i32
    %0 = arith.muli %arg0, %c1_i32 : i32
    %1 = arith.addi %0, %arg2 : i32
    %c0_i32 = arith.constant 0 : i32
    return %1, %arg1 : i32, i32
  }
  func.func @transform_2(%arg0: i32, %arg1: i32, %arg2: i32) -> (i32, i32, i32, i32) {
    %c0_i32 = arith.constant 0 : i32
    %c0_i32_0 = arith.constant 0 : i32
    %c0_i32_1 = arith.constant 0 : i32
    return %arg0, %arg1, %c0_i32, %c0_i32_0 : i32, i32, i32, i32
  }
}

</mosaic_0001>

<llo_original>
// kernel: tpu_custom_call.1
$region0: #{tpu_custom_call.1}
  #allocation0 [shape = 'u32[]', space=smem, size = 0x4, offset = 0x4, fixed_abs, tag = 'smem constant byte address 0x4 - core index']
  #allocation1 [shape = 'u32[144,128]{1,0:T(1,128)}', space=vmem, size = 0x12000, scoped, tag = 'internal scratch']
  #allocation2 [shape = 'f32[8,128]{1,0:T(8,128)}', space=vmem, size = 0x1000, scoped, tag = 'scratch operand']
  %s0 = inlined_call_operand.hbm [shape: f32[16,128], index: 0, kind: input, shape index: {}]
  %s1 = inlined_call_operand.hbm [shape: f32[16,128], index: 1, kind: input, shape index: {}]
  %s2 = inlined_call_operand.hbm [shape: f32[1,1,8,128], index: 2, kind: output, shape index: {}]
  %s3 = sld [smem:[#allocation0]]
  $region34: #{tpu_custom_call.1} parent=0
    _
  %s5 = ssub.s32 1, %s3
  %s6 = scalar_select 0, %s5, %s3
  $region1: #{tpu_custom_call.1} parent=0
    #allocation3 [shape = 'u8[8192]{0}', space=vmem, size = 0x2000, scoped, tag = 'input window, operand 0, single buffered']
    #allocation4 [shape = 's32[1]{0}', space=sflag, size = 0x4, scoped, tag = 'scoped memory for tpu_custom_call.1']
    #allocation5 [shape = 's32[1]{0}', space=sflag, size = 0x4, scoped, tag = 'scoped memory for tpu_custom_call.1']
    #allocation6 [shape = 'u8[8192]{0}', space=vmem, size = 0x2000, scoped, tag = 'input window, operand 1, single buffered']
    #allocation7 [shape = 's32[1]{0}', space=sflag, size = 0x4, scoped, tag = 'scoped memory for tpu_custom_call.1']
    #allocation8 [shape = 'u8[4096]{0}', space=vmem, size = 0x1000, scoped, tag = 'output window, operand 0, single buffered']
    %7 = vsyncpa [#allocation4], 0
    %8 = vsyncpa [#allocation7], 0
    %9 = vsyncpa [#allocation5], 0
    // Predicated region
    $region2: #{tpu_custom_call.1} parent=1 // pred_check
      _
    $region3: #{tpu_custom_call.1} parent=1 // pred_check_branch
      %11 = sbr.rel (0) target = $region5
    $region4: #{tpu_custom_call.1} parent=1 // pred_region
      %s12 = sadd.s32 0, 0
      %s13 = smul.u32 2, %s12
      %s15 = ssub.s32 256, 256
      %16 = vsyncadd [#allocation4], %s15
      %s17 = smul.addr %s13, 128
      %s18 = scalar_lea.hbm %s0, %s17
      %s19 = sshll.u32 [#allocation3], 4
      %s20 = int_to_ptr.vmem [resolvable:$true] %s19
      %25 = dma.hbm_to_vmem [thread:$0]  %s18, 256, %s20, [#allocation4], 128, 128, 8
    $region5: #{tpu_custom_call.1} parent=1 // pred_fallthru
      _
    // Predicated region
    $region6: #{tpu_custom_call.1} parent=1 // pred_check
      _
    $region7: #{tpu_custom_call.1} parent=1 // pred_check_branch
      %27 = sbr.rel (0) target = $region9
    $region8: #{tpu_custom_call.1} parent=1 // pred_region
      %s28 = sadd.s32 0, 0
      %s29 = smul.u32 2, %s28
      %s31 = ssub.s32 256, 256
      %32 = vsyncadd [#allocation7], %s31
      %s33 = smul.addr %s29, 128
      %s34 = scalar_lea.hbm %s1, %s33
      %s35 = sshll.u32 [#allocation6], 4
      %s36 = int_to_ptr.vmem [resolvable:$true] %s35
      %41 = dma.hbm_to_vmem [thread:$0]  %s34, 256, %s36, [#allocation7], 128, 128, 8
    $region9: #{tpu_custom_call.1} parent=1 // pred_fallthru
      _
    // Predicated region
    $region10: #{tpu_custom_call.1} parent=1 // pred_check
      _
    $region11: #{tpu_custom_call.1} parent=1 // pred_check_branch
      %43 = sbr.rel (0) target = $region13
    $region12: #{tpu_custom_call.1} parent=1 // pred_region
      %44 = dma.done [#allocation4], 256
    $region13: #{tpu_custom_call.1} parent=1 // pred_fallthru
      _
    // Predicated region
    $region14: #{tpu_custom_call.1} parent=1 // pred_check
      _
    $region15: #{tpu_custom_call.1} parent=1 // pred_check_branch
      %46 = sbr.rel (0) target = $region17
    $region16: #{tpu_custom_call.1} parent=1 // pred_region
      %47 = dma.done [#allocation7], 256
    $region17: #{tpu_custom_call.1} parent=1 // pred_fallthru
      _
    %s48 = sadd.s32 0, 0
    %s49 = smul.u32 2, %s48
    %s50 = sadd.s32 0, 0
    %s51 = smul.u32 2, %s50
    %p52 = scmp.eq.s32.totalorder 0, 0
    // Predicated region
    $region18: #{tpu_custom_call.1} parent=1 // pred_check
      %p53 = pneg %p52
    $region19: #{tpu_custom_call.1} parent=1 // pred_check_branch
      %55 = sbr.rel (%p53) target = $region21
    $region20: #{tpu_custom_call.1} parent=1 // pred_region
      %56 = vst [vmem:[#allocation2] sm:$0xff] 0.0
    $region21: #{tpu_custom_call.1} parent=1 // pred_fallthru
      _
    %v57 = vld [vmem:[#allocation3] sm:$0xff]
    %v58 = vld [vmem:[#allocation3 + $0x8] sm:$0xff]
    %v59 = vld [vmem:[#allocation6] sm:$0xff]
    %v60 = vld [vmem:[#allocation6 + $0x8] sm:$0xff]
    %v61 = vsub.f32 %v57, %v59
    %v62 = vsub.f32 %v58, %v60
    %v63 = vand.u32 2147483647, %v61
    %v64 = vand.u32 2147483647, %v62
    %v65 = vadd.f32 %v63, %v64
    %v66 = vld [vmem:[#allocation2] sm:$0xff]
    %v67 = vadd.f32 %v66, %v65
    %68 = vst [vmem:[#allocation2] sm:$0xff] %v67
    // Predicated region
    $region22: #{tpu_custom_call.1} parent=1 // pred_check
      %p69 = pneg %p52
    $region23: #{tpu_custom_call.1} parent=1 // pred_check_branch
      %71 = sbr.rel (%p69) target = $region25
    $region24: #{tpu_custom_call.1} parent=1 // pred_region
      %v72 = vld [vmem:[#allocation2] sm:$0xff]
      %73 = vadd.xlane.f32.xlu0 %v72
      %v74 = vpop.xlane.xlu0 %73
      %v75 = vrot.slane %v74, 4
      %v76 = vadd.f32 %v74, %v75
      %v77 = vrot.slane %v76, 2
      %v78 = vadd.f32 %v76, %v77
      %v79 = vrot.slane %v78, 1
      %v80 = vadd.f32 %v78, %v79
      %s81 = vtos %v80
      %v82 = vstv %s81
      %83 = vst [vmem:[#allocation8] sm:$0xff] %v82
    $region25: #{tpu_custom_call.1} parent=1 // pred_fallthru
      _
    // Predicated region
    $region26: #{tpu_custom_call.1} parent=1 // pred_check
      _
    $region27: #{tpu_custom_call.1} parent=1 // pred_check_branch
      %85 = sbr.rel (0) target = $region29
    $region28: #{tpu_custom_call.1} parent=1 // pred_region
      %s87 = ssub.s32 128, 128
      %88 = vsyncadd [#allocation5], %s87
      %s90 = sshll.u32 [#allocation8], 4
      %s91 = int_to_ptr.vmem [resolvable:$true] %s90
      %93 = dma.vmem_to_hbm [thread:$0]  %s91, 128, %s2, [#allocation5]
    $region29: #{tpu_custom_call.1} parent=1 // pred_fallthru
      _
    // Predicated region
    $region30: #{tpu_custom_call.1} parent=1 // pred_check
      _
    $region31: #{tpu_custom_call.1} parent=1 // pred_check_branch
      %95 = sbr.rel (0) target = $region33
    $region32: #{tpu_custom_call.1} parent=1 // pred_region
      %96 = dma.done [#allocation5], 128
    $region33: #{tpu_custom_call.1} parent=1 // pred_fallthru
      _
    %97 = vsyncpa [#allocation4], 1
    %98 = vsyncpa [#allocation7], 1
    %99 = vsyncpa [#allocation5], 1

</llo_original>
